<compile_context>
chip_gen: v6e
topology: v6e:2x2x1
jax: 0.10.0
libtpu: 0.0.40
codegen_flags: <defaults>
</compile_context>

<pallas_src>
import functools

import jax
import jax.numpy as jnp
from jax.experimental import pallas as pl
from jax.experimental.pallas import tpu as pltpu

_LANE = 128
_BASE_SUBLANE = 8
_MAX_TILE_ROWS = 1024


def _b2_quant_kernel(x_ref, o_ref, *, true_k):
    # x_ref / o_ref: (TILE_O, K) tile in VMEM. Rows past O in the ragged last
    # block are undefined but never written back (strictly per-row math).
    x = x_ref[...].astype(jnp.float32)

    inv_k = 1.0 / float(true_k)
    mean = jnp.sum(x, axis=1, keepdims=True) * inv_k
    centered = x - mean

    # Unbiased (ddof=1) variance, two-pass (matches PyTorch center-then-std;
    # no one-pass cancellation NaNs). K == 1 -> NaN, same as torch.std.
    inv_km1 = 1.0 / float(true_k - 1) if true_k > 1 else float("nan")
    var = jnp.sum(centered * centered, axis=1, keepdims=True) * inv_km1
    inv_std = jax.lax.rsqrt(var)

    bw = jnp.clip(centered * inv_std, -1.0, 1.0)

    # 2-bit quantization: x=(bw+1)/2 ; x=round(3x)/3 ; x=(x-0.5)*2
    q = jnp.round((bw + 1.0) * 0.5 * 3.0) * (1.0 / 3.0)
    o_ref[...] = ((q - 0.5) * 2.0).astype(o_ref.dtype)


def _reference_jax(w):
    """Pure-JAX mirror of the PyTorch module (compute in f32)."""
    O = w.shape[0]
    wf = w.astype(jnp.float32)
    flat = wf.reshape(O, -1)
    mean = flat.mean(-1).reshape(O, 1, 1, 1)
    bw = wf - mean
    std = jnp.std(bw.reshape(O, -1), axis=-1, ddof=1).reshape(O, 1, 1, 1)
    bw = jnp.clip(bw / std, -1.0, 1.0)
    y = 3.0
    x = (bw + 1.0) / 2.0
    x = jnp.round(x * y) / y
    x = (x - 0.5) * 2.0
    return x


def _vmem_capacity_bytes():
    try:
        info = pltpu.get_tpu_info()
        cap = getattr(info, "vmem_capacity_bytes", None)
        if cap:
            return int(cap)
    except Exception:
        pass
    return 64 * 1024 * 1024  # conservative (v7x per-TC VMEM)


def b2_weight_quantize(w):
    """w: (O, C, KH, KW) float conv weight. Returns same shape/dtype."""
    O, C, KH, KW = w.shape
    K = C * KH * KW

    # Tiny layers: pallas_call fixed overhead and <128-lane rows dominate;
    # plain XLA is faster and numerically equivalent.
    if K < _LANE:
        return _reference_jax(w).astype(w.dtype)

    x2d = w.reshape(O, K)
    itemsize = jnp.dtype(w.dtype).itemsize
    # Packed-sublane multiple: 8 for f32, 16 for bf16, 32 for int8/fp8.
    sublane = _BASE_SUBLANE * max(1, 4 // itemsize)

    vmem_cap = _vmem_capacity_bytes()
    # ~48 MiB of pipelined buffers on v5e/v6e (128 MiB VMEM), ~24 MiB on v7x.
    buf_budget = min(48 << 20, (vmem_cap * 3) // 8)
    # 2x input + 2x output double buffers (dtype-sized) + f32 intermediates
    # for the single live tile.
    bytes_per_row = 4 * K * itemsize + 3 * K * 4
    max_rows = max(sublane, buf_budget // bytes_per_row)

    tile_o = max(sublane, (max_rows // sublane) * sublane)
    tile_o = min(tile_o, _MAX_TILE_ROWS)
    # Keep at least 2 grid steps when O allows, so both v7x TensorCores get
    # work (and the pipeline has something to overlap on every generation).
    if O >= 2 * sublane:
        half = (((O + 1) // 2 + sublane - 1) // sublane) * sublane
        tile_o = min(tile_o, half)
    o_rounded = ((O + sublane - 1) // sublane) * sublane
    tile_o = min(tile_o, o_rounded)

    grid = (pl.cdiv(O, tile_o),)
    vmem_limit = int(min((vmem_cap * 3) // 4, 2 * buf_budget + (16 << 20)))

    out2d = pl.pallas_call(
        functools.partial(_b2_quant_kernel, true_k=K),
        out_shape=jax.ShapeDtypeStruct((O, K), w.dtype),
        grid=grid,
        in_specs=[pl.BlockSpec((tile_o, K), lambda i: (i, 0))],
        out_specs=pl.BlockSpec((tile_o, K), lambda i: (i, 0)),
        compiler_params=pltpu.CompilerParams(
            dimension_semantics=("parallel",),
            vmem_limit_bytes=vmem_limit,
        ),
    )(x2d)

    return out2d.reshape(O, C, KH, KW)


if __name__ == "__main__":
    key = jax.random.PRNGKey(0)
    k1, k2, k3 = jax.random.split(key, 3)

    # Tiny conv weight (K = 36 < 128): XLA fallback path.
    w_small = jax.random.normal(k1, (8, 4, 3, 3), dtype=jnp.float32)
    # Medium f32 layer (K = 144, not a multiple of 128; forced 2-step grid).
    w_med = jax.random.normal(k2, (32, 16, 3, 3), dtype=jnp.float32)
    # bf16 layer (dtype-aware sublane tiling, ragged trailing O block).
    w_bf16 = jax.random.normal(k3, (48, 32, 3, 3), dtype=jnp.float32).astype(
        jnp.bfloat16
    )

    out_small = b2_weight_quantize(w_small)
    out_med = b2_weight_quantize(w_med)
    out_bf16 = b2_weight_quantize(w_bf16)
    jax.block_until_ready((out_small, out_med, out_bf16))

    for w, out in ((w_small, out_small), (w_med, out_med), (w_bf16, out_bf16)):
        assert out.shape == w.shape and out.dtype == w.dtype
        ref = _reference_jax(w).astype(w.dtype)
        assert jnp.allclose(
            out.astype(jnp.float32), ref.astype(jnp.float32), atol=1e-5, rtol=1e-5
        )

    print("KERNEL_OK")
</pallas_src>

<mosaic_0001>
module attributes {stable_mosaic.version = 11 : i64} {
  func.func @_b2_quant_kernel(%arg0: i32, %arg1: memref<16x144xf32, #tpu.memory_space<vmem>>, %arg2: memref<16x144xf32, #tpu.memory_space<vmem>>) attributes {dimension_semantics = [#tpu.dimension_semantics<parallel>], iteration_bounds = array<i64: 2>, scalar_prefetch = 0 : i64, scratch_operands = 0 : i64, tpu.core_type = #tpu.core_type<tc>, window_params = [{transform_indices = @transform_0, window_bounds = array<i64: 16, 144>}, {transform_indices = @transform_1, window_bounds = array<i64: 16, 144>}]} {
    %c0 = arith.constant 0 : index
    %c0_0 = arith.constant 0 : index
    %0 = vector.load %arg1[%c0, %c0_0] : memref<16x144xf32, #tpu.memory_space<vmem>>, vector<16x144xf32>
    %cst = arith.constant dense<0.000000e+00> : vector<16xf32>
    %1 = vector.multi_reduction <add>, %0, %cst [1] : vector<16x144xf32> to vector<16xf32>
    %2 = vector.shape_cast %1 : vector<16xf32> to vector<16x1xf32>
    %cst_1 = arith.constant 0.0069444445 : f32
    %3 = vector.broadcast %cst_1 : f32 to vector<16x1xf32>
    %4 = arith.mulf %2, %3 : vector<16x1xf32>
    %5 = vector.broadcast %4 : vector<16x1xf32> to vector<16x144xf32>
    %6 = arith.subf %0, %5 : vector<16x144xf32>
    %7 = arith.mulf %6, %6 : vector<16x144xf32>
    %cst_2 = arith.constant dense<0.000000e+00> : vector<16xf32>
    %8 = vector.multi_reduction <add>, %7, %cst_2 [1] : vector<16x144xf32> to vector<16xf32>
    %9 = vector.shape_cast %8 : vector<16xf32> to vector<16x1xf32>
    %cst_3 = arith.constant 0.00699300691 : f32
    %10 = vector.broadcast %cst_3 : f32 to vector<16x1xf32>
    %11 = arith.mulf %9, %10 : vector<16x1xf32>
    %12 = math.rsqrt %11 : vector<16x1xf32>
    %13 = vector.broadcast %12 : vector<16x1xf32> to vector<16x144xf32>
    %14 = arith.mulf %6, %13 : vector<16x144xf32>
    %cst_4 = arith.constant -1.000000e+00 : f32
    %cst_5 = arith.constant 1.000000e+00 : f32
    %15 = vector.broadcast %cst_4 : f32 to vector<16x144xf32>
    %16 = arith.maximumf %15, %14 : vector<16x144xf32>
    %17 = vector.broadcast %cst_5 : f32 to vector<16x144xf32>
    %18 = arith.minimumf %17, %16 : vector<16x144xf32>
    %cst_6 = arith.constant 1.000000e+00 : f32
    %19 = vector.broadcast %cst_6 : f32 to vector<16x144xf32>
    %20 = arith.addf %18, %19 : vector<16x144xf32>
    %cst_7 = arith.constant 5.000000e-01 : f32
    %21 = vector.broadcast %cst_7 : f32 to vector<16x144xf32>
    %22 = arith.mulf %20, %21 : vector<16x144xf32>
    %cst_8 = arith.constant 3.000000e+00 : f32
    %23 = vector.broadcast %cst_8 : f32 to vector<16x144xf32>
    %24 = arith.mulf %22, %23 : vector<16x144xf32>
    %25 = math.roundeven %24 : vector<16x144xf32>
    %cst_9 = arith.constant 0.333333343 : f32
    %26 = vector.broadcast %cst_9 : f32 to vector<16x144xf32>
    %27 = arith.mulf %25, %26 : vector<16x144xf32>
    %cst_10 = arith.constant 5.000000e-01 : f32
    %28 = vector.broadcast %cst_10 : f32 to vector<16x144xf32>
    %29 = arith.subf %27, %28 : vector<16x144xf32>
    %cst_11 = arith.constant 2.000000e+00 : f32
    %30 = vector.broadcast %cst_11 : f32 to vector<16x144xf32>
    %31 = arith.mulf %29, %30 : vector<16x144xf32>
    %c0_12 = arith.constant 0 : index
    %c0_13 = arith.constant 0 : index
    %32 = vector.load %arg2[%c0_12, %c0_13] : memref<16x144xf32, #tpu.memory_space<vmem>>, vector<16x144xf32>
    tpu.vector_store %arg2[%c0_12, %c0_13], %31 {strides = array<i32>} : memref<16x144xf32, #tpu.memory_space<vmem>>, vector<16x144xf32>,
    return
  }
  func.func @transform_0(%arg0: i32) -> (i32, i32) {
    %c0_i32 = arith.constant 0 : i32
    %c0_i32_0 = arith.constant 0 : i32
    return %arg0, %c0_i32 : i32, i32
  }
  func.func @transform_1(%arg0: i32) -> (i32, i32) {
    %c0_i32 = arith.constant 0 : i32
    %c0_i32_0 = arith.constant 0 : i32
    return %arg0, %c0_i32 : i32, i32
  }
}

</mosaic_0001>

<llo_original>
// kernel: tpu_custom_call.1
$region0: #{tpu_custom_call.1}
  #allocation0 [shape = 'u32[]', space=smem, size = 0x4, offset = 0x4, fixed_abs, tag = 'smem constant byte address 0x4 - core index']
  #allocation1 [shape = 'u32[144,128]{1,0:T(1,128)}', space=vmem, size = 0x12000, scoped, tag = 'internal scratch']
  %s0 = inlined_call_operand.hbm [shape: f32[32,144], index: 0, kind: input, shape index: {}]
  %s1 = inlined_call_operand.hbm [shape: f32[32,144], index: 1, kind: output, shape index: {}]
  %s2 = sld [smem:[#allocation0]]
  $region41: #{tpu_custom_call.1} parent=0
    _
  %s4 = ssub.s32 1, %s2
  %s5 = scalar_select 0, %s4, %s2
  $region1: #{tpu_custom_call.1} parent=0
    #allocation2 [shape = 'u8[32768]{0}', space=vmem, size = 0x8000, scoped, tag = 'input window, operand 0']
    #allocation3 [shape = 's32[2]{0}', space=sflag, size = 0x8, scoped, tag = 'scoped memory for tpu_custom_call.1']
    #allocation4 [shape = 's32[2]{0}', space=sflag, size = 0x8, scoped, tag = 'scoped memory for tpu_custom_call.1']
    #allocation5 [shape = 'u8[32768]{0}', space=vmem, size = 0x8000, scoped, tag = 'output window, operand 0']
    %6 = vsyncpa [#allocation3], 0
    %s7 = scalar_lea.sflag [#allocation3], 1
    %8 = vsyncpa %s7, 0
    %9 = vsyncpa [#allocation4], 0
    %s10 = scalar_lea.sflag [#allocation4], 1
    %11 = vsyncpa %s10, 0
    loop: start=0, step=1, limit=4
    $region2: #{tpu_custom_call.1} parent=1 // loop_pre_header
      _
    $region3: #{tpu_custom_call.1} parent=1 // loop_header
      %s13 = sphi 0, %s17
      %p14 = scmp.ge.s32.totalorder %s13, 4
      %s23 = sphi 0, %s25
      %s26 = sphi 0, %s23
      %s27 = sphi 0, %s26
      %s43 = sphi 0, %s27
      %s49 = sphi 0, %s51
      %s52 = sphi 0, %s49
      %s53 = sphi 0, %s52
      %s69 = sphi 0, %s53
    $region4: #{tpu_custom_call.1} parent=1 // loop_header_branch
      %16 = sbr.rel (%p14) target = $region8
    $region5: #{tpu_custom_call.1} parent=1 // loop_body
      %s18 = ssub.s32 %s13, 1
      %s19 = ssub.s32 %s13, 2
      %s20 = sadd.s32 %s13, 1
      %s21 = ssub.s32 %s13, %s20
      %p22 = scmp.eq.s32.totalorder %s21, 0
      %s24 = sadd.s32 %s23, 1
      %s25 = scalar_select %p22, %s23, %s24
      %p28 = pneg %p22
      %p29 = scmp.eq.s32.totalorder %s13, 1
      %p30 = por %p28, %p29
      %p31 = scmp.ne.s32.totalorder %s23, %s26
      %p32 = scmp.eq.s32.totalorder %s13, 0
      %p33 = por %p31, %p32
      %p34 = scmp.ne.s32.totalorder %s23, %s26
      %p35 = scmp.eq.s32.totalorder %s18, 1
      %p36 = por %p34, %p35
      %p37 = scmp.ne.s32.totalorder %s26, %s27
      %p38 = scmp.eq.s32.totalorder %s18, 0
      %p39 = por %p37, %p38
      %p40 = scmp.ne.s32.totalorder %s26, %s27
      %p41 = scmp.eq.s32.totalorder %s19, 1
      %p42 = por %p40, %p41
      %p44 = scmp.ne.s32.totalorder %s27, %s43
      %p45 = scmp.eq.s32.totalorder %s19, 0
      %p46 = por %p44, %p45
      %s47 = ssub.s32 %s13, %s20
      %p48 = scmp.eq.s32.totalorder %s47, 0
      %s50 = sadd.s32 %s49, 1
      %s51 = scalar_select %p48, %s49, %s50
      %p54 = pneg %p48
      %p55 = scmp.eq.s32.totalorder %s13, 1
      %p56 = por %p54, %p55
      %p57 = scmp.ne.s32.totalorder %s49, %s52
      %p58 = scmp.eq.s32.totalorder %s13, 0
      %p59 = por %p57, %p58
      %p60 = scmp.ne.s32.totalorder %s49, %s52
      %p61 = scmp.eq.s32.totalorder %s18, 1
      %p62 = por %p60, %p61
      %p63 = scmp.ne.s32.totalorder %s52, %s53
      %p64 = scmp.eq.s32.totalorder %s18, 0
      %p65 = por %p63, %p64
      %p66 = scmp.ne.s32.totalorder %s52, %s53
      %p67 = scmp.eq.s32.totalorder %s19, 1
      %p68 = por %p66, %p67
      %p70 = scmp.ne.s32.totalorder %s53, %s69
      %p71 = scmp.eq.s32.totalorder %s19, 0
      %p72 = por %p70, %p71
      %p73 = scmp.le.s32.totalorder 1, %s13
      %p74 = scmp.lt.s32.totalorder %s13, 3
      %p75 = pnand %p73, %p74
      %p76 = pneg %p75
      // Predicated region
      $region9: #{tpu_custom_call.1} parent=5 // pred_check
        _
      $region10: #{tpu_custom_call.1} parent=5 // pred_check_branch
        %78 = sbr.rel (%p75) target = $region12
      $region11: #{tpu_custom_call.1} parent=5 // pred_region
        %s79 = ssub.s32 %s13, 1
      $region12: #{tpu_custom_call.1} parent=5 // pred_fallthru
        _
      %p80 = scmp.lt.s32.totalorder %s13, 2
      // Predicated region
      $region13: #{tpu_custom_call.1} parent=5 // pred_check
        %p81 = pneg %p80
      $region14: #{tpu_custom_call.1} parent=5 // pred_check_branch
        %83 = sbr.rel (%p81) target = $region16
      $region15: #{tpu_custom_call.1} parent=5 // pred_region
        // Predicated region
        $region17: #{tpu_custom_call.1} parent=15 // pred_check
          %p84 = pneg %p33
        $region18: #{tpu_custom_call.1} parent=15 // pred_check_branch
          %86 = sbr.rel (%p84) target = $region20
        $region19: #{tpu_custom_call.1} parent=15 // pred_region
          %s87 = sand.u32 %s23, 1
          %s88 = scalar_lea.sflag [#allocation3], %s87
          %s89 = sand.u32 %s23, 1
          %s90 = smul.addr %s89, 32
          %s91 = scalar_lea.vmem [#allocation2], %s90
          %s92 = smul.u32 2, %s13
          %s94 = ssub.s32 512, 512
          %95 = vsyncadd %s88, %s94
          %s96 = smul.addr %s92, 2
          %s97 = smul.addr %s96, 128
          %s98 = scalar_lea.hbm %s0, %s97
          %s99 = sshll.u32 %s91, 4
          %s100 = int_to_ptr.vmem [resolvable:$true] %s99
          %105 = dma.hbm_to_vmem [thread:$0]  %s98, 512, %s100, %s88, 256, 256, 16
        $region20: #{tpu_custom_call.1} parent=15 // pred_fallthru
          _
      $region16: #{tpu_custom_call.1} parent=5 // pred_fallthru
        _
      %p106 = scmp.le.s32.totalorder 1, %s13
      %p107 = scmp.lt.s32.totalorder %s13, 3
      %p108 = pnand %p106, %p107
      %p109 = pneg %p108
      // Predicated region
      $region21: #{tpu_custom_call.1} parent=5 // pred_check
        _
      $region22: #{tpu_custom_call.1} parent=5 // pred_check_branch
        %111 = sbr.rel (%p108) target = $region24
      $region23: #{tpu_custom_call.1} parent=5 // pred_region
        %s112 = ssub.s32 %s13, 1
        %s113 = sand.u32 %s26, 1
        %s114 = scalar_lea.sflag [#allocation3], %s113
        %s115 = sand.u32 %s26, 1
        %s116 = smul.addr %s115, 32
        %s117 = scalar_lea.vmem [#allocation2], %s116
        // Predicated region
        $region25: #{tpu_custom_call.1} parent=23 // pred_check
          %p118 = pneg %p39
        $region26: #{tpu_custom_call.1} parent=23 // pred_check_branch
          %120 = sbr.rel (%p118) target = $region28
        $region27: #{tpu_custom_call.1} parent=23 // pred_region
          %121 = dma.done %s114, 512
        $region28: #{tpu_custom_call.1} parent=23 // pred_fallthru
          _
        %s122 = sand.u32 %s26, 1
        %s123 = scalar_lea.sflag [#allocation3], %s122
        %s124 = sand.u32 %s26, 1
        %s125 = smul.addr %s124, 32
        %s126 = scalar_lea.vmem [#allocation2], %s125
        %p127 = pneg %p39
        %p128 = pneg %p36
        %p129 = pneg %p65
        %p130 = pneg %p62
        %s131 = sand.u32 %s52, 1
        %s132 = scalar_lea.sflag [#allocation4], %s131
        %s133 = sand.u32 %s52, 1
        %s134 = smul.addr %s133, 32
        %s135 = scalar_lea.vmem [#allocation5], %s134
        %s136 = smul.u32 2, %s18
        %s137 = smul.u32 2, %s18
        %v138 = vld [vmem:[%s117] sm:$0xff]
        %v139 = vld [vmem:[%s117 + $0x8] sm:$0xff]
        %v140 = vld [vmem:[%s117 + $0x10] sm:$0xff]
        %v141 = vld [vmem:[%s117 + $0x18] sm:$0xff]
        %vm142 = vcmask 130048
        %v143 = vsel %vm142, %v139, 0.0
        %v144 = vadd.f32 %v138, %v143
        %145 = vadd.xlane.f32.xlu0 %v144
        %v146 = vpop.xlane.xlu0 %145
        %v147 = vsel %vm142, %v141, 0.0
        %v148 = vadd.f32 %v140, %v147
        %149 = vadd.xlane.f32.xlu0 %v148
        %v150 = vpop.xlane.xlu0 %149
        %v151 = vmul.f32 %v146, 0.0069444445
        %v152 = vmul.f32 %v150, 0.0069444445
        %v153 = vsub.f32 %v138, %v151
        %v154 = vsub.f32 %v139, %v151
        %v155 = vsub.f32 %v140, %v152
        %v156 = vsub.f32 %v141, %v152
        %v157 = vmul.f32 %v153, %v153
        %v158 = vmul.f32 %v154, %v154
        %v159 = vmul.f32 %v155, %v155
        %v160 = vmul.f32 %v156, %v156
        %v161 = vsel %vm142, %v158, 0.0
        %v162 = vadd.f32 %v157, %v161
        %163 = vadd.xlane.f32.xlu0 %v162
        %v164 = vpop.xlane.xlu0 %163
        %v165 = vsel %vm142, %v160, 0.0
        %v166 = vadd.f32 %v159, %v165
        %167 = vadd.xlane.f32.xlu0 %v166
        %v168 = vpop.xlane.xlu0 %167
        %v169 = vmul.f32 %v164, 0.006993007
        %v170 = vmul.f32 %v168, 0.006993007
        %v171 = vrsqrt.pop %v169
        %v172 = vrsqrt.pop %v170
        %v173 = vmul.f32 %v153, %v171
        %v174 = vmul.f32 %v154, %v171
        %v175 = vmul.f32 %v155, %v172
        %v176 = vmul.f32 %v156, %v172
        %v177 = vmax.f32 %v173, -1.0
        %v178 = vmax.f32 %v174, -1.0
        %v179 = vmax.f32 %v175, -1.0
        %v180 = vmax.f32 %v176, -1.0
        %v181 = vmin.f32 %v177, 1.0
        %v182 = vmin.f32 %v178, 1.0
        %v183 = vmin.f32 %v179, 1.0
        %v184 = vmin.f32 %v180, 1.0
        %v185 = vadd.f32 %v181, 1.0
        %v186 = vadd.f32 %v182, 1.0
        %v187 = vadd.f32 %v183, 1.0
        %v188 = vadd.f32 %v184, 1.0
        %v189 = vmul.f32 %v185, 0.5
        %v190 = vmul.f32 %v186, 0.5
        %v191 = vmul.f32 %v187, 0.5
        %v192 = vmul.f32 %v188, 0.5
        %v193 = vmul.f32 %v189, 3.0
        %v194 = vmul.f32 %v190, 3.0
        %v195 = vmul.f32 %v191, 3.0
        %v196 = vmul.f32 %v192, 3.0
        %v197 = vround.ne.pseudo %v193
        %v198 = vround.ne.pseudo %v194
        %v199 = vround.ne.pseudo %v195
        %v200 = vround.ne.pseudo %v196
        %v201 = vmul.f32 %v197, 0.33333334
        %v202 = vmul.f32 %v198, 0.33333334
        %v203 = vmul.f32 %v199, 0.33333334
        %v204 = vmul.f32 %v200, 0.33333334
        %v205 = vsub.f32 %v201, 0.5
        %v206 = vsub.f32 %v202, 0.5
        %v207 = vsub.f32 %v203, 0.5
        %v208 = vsub.f32 %v204, 0.5
        %v209 = vmul.f32 %v205, 2.0
        %v210 = vmul.f32 %v206, 2.0
        %v211 = vmul.f32 %v207, 2.0
        %v212 = vmul.f32 %v208, 2.0
        %213 = vst [vmem:[%s135] sm:$0xff] %v209
        %214 = vst.msk [vmem:[%s135 + $0x8] sm:$0xff] %vm142, %v210
        %215 = vst [vmem:[%s135 + $0x10] sm:$0xff] %v211
        %216 = vst.msk [vmem:[%s135 + $0x18] sm:$0xff] %vm142, %v212
        %s217 = sand.u32 %s52, 1
        %s218 = scalar_lea.sflag [#allocation4], %s217
        %s219 = sand.u32 %s52, 1
        %s220 = smul.addr %s219, 32
        %s221 = scalar_lea.vmem [#allocation5], %s220
        // Predicated region
        $region29: #{tpu_custom_call.1} parent=23 // pred_check
          %p222 = pneg %p62
        $region30: #{tpu_custom_call.1} parent=23 // pred_check_branch
          %224 = sbr.rel (%p222) target = $region32
        $region31: #{tpu_custom_call.1} parent=23 // pred_region
          %s225 = smul.u32 2, %s18
          %s227 = ssub.s32 512, 512
          %228 = vsyncadd %s218, %s227
          %s229 = smul.addr %s225, 2
          %s230 = smul.addr %s229, 128
          %s231 = scalar_lea.hbm %s1, %s230
          %s232 = sshll.u32 %s221, 4
          %s233 = int_to_ptr.vmem [resolvable:$true] %s232
          %238 = dma.vmem_to_hbm [thread:$0]  %s233, 512, %s231, %s218, 256, 256, 16
        $region32: #{tpu_custom_call.1} parent=23 // pred_fallthru
          _
      $region24: #{tpu_custom_call.1} parent=5 // pred_fallthru
        _
      %p239 = scmp.le.s32.totalorder 2, %s13
      // Predicated region
      $region33: #{tpu_custom_call.1} parent=5 // pred_check
        %p240 = pneg %p239
      $region34: #{tpu_custom_call.1} parent=5 // pred_check_branch
        %242 = sbr.rel (%p240) target = $region36
      $region35: #{tpu_custom_call.1} parent=5 // pred_region
        %s243 = ssub.s32 %s13, 2
        // Predicated region
        $region37: #{tpu_custom_call.1} parent=35 // pred_check
          %p244 = pneg %p68
        $region38: #{tpu_custom_call.1} parent=35 // pred_check_branch
          %246 = sbr.rel (%p244) target = $region40
        $region39: #{tpu_custom_call.1} parent=35 // pred_region
          %s247 = sand.u32 %s53, 1
          %s248 = scalar_lea.sflag [#allocation4], %s247
          %s249 = sand.u32 %s53, 1
          %s250 = smul.addr %s249, 32
          %s251 = scalar_lea.vmem [#allocation5], %s250
          %252 = dma.done %s248, 512
        $region40: #{tpu_custom_call.1} parent=35 // pred_fallthru
          _
      $region36: #{tpu_custom_call.1} parent=5 // pred_fallthru
        _
    $region6: #{tpu_custom_call.1} parent=1 // loop_footer
      %s17 = sadd.s32 1, %s13
    $region7: #{tpu_custom_call.1} parent=1 // loop_footer_branch
      %12 = sbr.rel target = $region3
    $region8: #{tpu_custom_call.1} parent=1 // loop_exit
      _
    %253 = vsyncpa [#allocation3], 1
    %s254 = scalar_lea.sflag [#allocation3], 1
    %255 = vsyncpa %s254, 1
    %256 = vsyncpa [#allocation4], 1
    %s257 = scalar_lea.sflag [#allocation4], 1
    %258 = vsyncpa %s257, 1

</llo_original>
